<compile_context>
chip_gen: v7x
topology: tpu7x:2x2x1
jax: 0.10.0
libtpu: 0.0.40
codegen_flags: <defaults>
</compile_context>

<pallas_src>
import functools
import math

import jax
import jax.numpy as jnp
from jax import lax
from jax.experimental import pallas as pl
from jax.experimental.pallas import tpu as pltpu

EPS = 1e-5
LANE = 128
TARGET_TILE_BYTES = 4 << 20       # ~4 MiB of HBM traffic per x tile
VMEM_PER_BUFFER_BYTES = 20 << 20  # keeps 2x double-buffered tiles < ~40 MiB
VMEM_LIMIT_BYTES = 48 << 20       # > v5e/v6e scoped default, < v7x 64 MiB phys


def _round_up(v, m):
    return (v + m - 1) // m * m


def _lcm(a, b):
    return a * b // math.gcd(a, b)


def _pick_tile_rows(M, quantum, hbm_bytes_per_row, vmem_bytes_per_row,
                    max_rows=None):
    """Largest multiple of `quantum` dividing M whose tile fits the per-tile
    HBM byte target and the per-buffer VMEM budget."""
    if M % quantum != 0:
        # TODO(synk): zero-pad M up to a quantum multiple instead of a single
        # full-extent tile (only hit for awkward N*H*W shapes; exact either way).
        return M
    cap = min(TARGET_TILE_BYTES // max(hbm_bytes_per_row, 1),
              VMEM_PER_BUFFER_BYTES // max(vmem_bytes_per_row, 1))
    if max_rows is not None:
        cap = min(cap, max_rows)
    cap = max(quantum, min(cap, M))
    nq = M // quantum
    for k in range(min(cap // quantum, nq), 0, -1):
        if nq % k == 0:
            return k * quantum
    return quantum


# ------------------------- phase 1: input statistics -------------------------
def _stats_kernel(x_ref, xsum_ref, gram_ref):
    # x_ref    : (tm, Cin)        streamed pixel rows (NHWC raster order)
    # xsum_ref : (1, 1, Cin)      resident per-core partial sum(x)
    # gram_ref : (1, Cin, Cin)    resident per-core partial x^T x
    @pl.when(pl.program_id(1) == 0)
    def _init():
        xsum_ref[...] = jnp.zeros_like(xsum_ref)
        gram_ref[...] = jnp.zeros_like(gram_ref)

    x = x_ref[...]
    xsum_ref[...] += jnp.sum(x.astype(jnp.float32), axis=0, keepdims=True)[None]
    gram_ref[...] += lax.dot_general(
        x, x, dimension_numbers=(((0,), (0,)), ((), ())),
        preferred_element_type=jnp.float32)[None]


# ---------------- phase 2: conv(+folded BN) -> ReLU -> 2x2 avg-pool ----------
def _conv_bn_relu_pool_kernel(x_ref, w_ref, shift_ref, o_ref, *, width):
    # x_ref : (tm, Cin) raster rows; w_ref : (Cin, Cp) scale-folded weight
    # shift_ref : (1, Cp) ; o_ref : (tm//4, Cp)
    y = jnp.dot(x_ref[...], w_ref[...], preferred_element_type=jnp.float32)
    y = jnp.maximum(y + shift_ref[...], 0.0)
    tm, cp = y.shape
    # 2x2 average pool done in-kernel (tm is a multiple of 2*width, so the tile
    # holds whole image-row pairs): horizontal pairs then vertical pairs.
    sw = jnp.sum(y.reshape(tm // 2, 2, cp), axis=1)
    sv = jnp.sum(sw.reshape(tm // (2 * width), 2, width // 2, cp), axis=1)
    o_ref[...] = (sv.reshape(tm // 4, cp) * 0.25).astype(o_ref.dtype)


def transition_block(x, conv_w, conv_b, bn_gamma, bn_beta, *,
                     matmul_dtype=jnp.bfloat16, max_tile_rows=None):
    """Forward of TrasitionBlock: Conv1x1 -> BN(train) -> ReLU -> AvgPool2x2.

    x: (N, Cin, H, W) NCHW float32.  Returns (N, Cout, H//2, W//2) float32.
    """
    del conv_b  # exact: training-mode BN's batch-mean subtraction cancels it
    N, Cin, H, W = x.shape
    Cout = conv_w.shape[0]
    assert H % 2 == 0 and W % 2 == 0, "AvgPool2d(2,2) needs even H, W"
    Ho, Wo = H // 2, W // 2
    M = N * H * W
    Npool = M // 4
    Cp = _round_up(Cout, LANE)                 # lane-dense output channels
    xbytes = jnp.dtype(matmul_dtype).itemsize
    cin_lanes = _round_up(Cin, LANE)           # VMEM lane padding of the x tile

    # Single NCHW -> NHWC relayout (pixels as rows, channels on lanes).  The
    # pool-window regrouping is done inside the kernel, not as a second relayout.
    # TODO(synk): with channels-last (NHWC) input this transpose disappears.
    x_rows = jnp.transpose(x, (0, 2, 3, 1)).reshape(M, Cin).astype(matmul_dtype)

    # 1x1 conv weight -> (Cin, Cp) f32, zero-padded extra channels.
    w_f32 = jnp.zeros((Cin, Cp), jnp.float32).at[:, :Cout].set(
        jnp.transpose(conv_w.reshape(Cout, Cin), (1, 0)).astype(jnp.float32))

    # -------------------- phase 1: sum(x) and Gram(x) ------------------------
    tm1 = _pick_tile_rows(M, 8, Cin * xbytes, cin_lanes * xbytes, max_tile_rows)
    nt1 = M // tm1
    nsplit = 2 if (nt1 % 2 == 0 and nt1 >= 2) else 1   # v7x megacore split
    nt_in = nt1 // nsplit

    xsum_p, gram_p = pl.pallas_call(
        _stats_kernel,
        out_shape=(jax.ShapeDtypeStruct((nsplit, 1, Cin), jnp.float32),
                   jax.ShapeDtypeStruct((nsplit, Cin, Cin), jnp.float32)),
        grid=(nsplit, nt_in),
        in_specs=[pl.BlockSpec((tm1, Cin), lambda c, i: (c * nt_in + i, 0))],
        out_specs=(pl.BlockSpec((1, 1, Cin), lambda c, i: (c, 0, 0)),
                   pl.BlockSpec((1, Cin, Cin), lambda c, i: (c, 0, 0))),
        compiler_params=pltpu.CompilerParams(
            dimension_semantics=("parallel", "arbitrary"),
            vmem_limit_bytes=VMEM_LIMIT_BYTES),
        cost_estimate=pl.CostEstimate(
            flops=2 * M * Cin * Cin + M * Cin,
            transcendentals=0,
            bytes_accessed=M * Cin * xbytes + nsplit * (Cin + Cin * Cin) * 4),
    )(x_rows)

    # Host-side fold (tiny): batch mean/var of y = x @ W, then BN scale/shift.
    sum_x = jnp.sum(xsum_p, axis=0)                         # (1, Cin)
    gram = jnp.sum(gram_p, axis=0)                          # (Cin, Cin)
    mean = (sum_x / M) @ w_f32                              # (1, Cp)
    e_y2 = jnp.sum(w_f32 * (gram @ w_f32), axis=0, keepdims=True) / M
    var = jnp.maximum(e_y2 - mean * mean, 0.0)              # biased variance
    gamma_p = jnp.zeros((1, Cp), jnp.float32).at[:, :Cout].set(
        bn_gamma.astype(jnp.float32))
    beta_p = jnp.zeros((1, Cp), jnp.float32).at[:, :Cout].set(
        bn_beta.astype(jnp.float32))
    scale = gamma_p * lax.rsqrt(var + EPS)
    shift = beta_p - mean * scale
    w_fold = (w_f32 * scale).astype(matmul_dtype)   # BN scale folded into weight

    # ------------- phase 2: matmul -> +shift -> ReLU -> 2x2 avg-pool ---------
    quantum2 = _lcm(32, 2 * W)   # tm//4 sublane-aligned + whole pool row-pairs
    tm2 = _pick_tile_rows(M, quantum2, Cin * xbytes + Cp,
                          cin_lanes * xbytes + Cp, max_tile_rows)
    nt2 = M // tm2

    out2d = pl.pallas_call(
        functools.partial(_conv_bn_relu_pool_kernel, width=W),
        out_shape=jax.ShapeDtypeStruct((Npool, Cp), jnp.float32),
        grid=(nt2,),
        in_specs=[pl.BlockSpec((tm2, Cin), lambda i: (i, 0)),
                  pl.BlockSpec((Cin, Cp), lambda i: (0, 0)),
                  pl.BlockSpec((1, Cp), lambda i: (0, 0))],
        out_specs=pl.BlockSpec((tm2 // 4, Cp), lambda i: (i, 0)),
        compiler_params=pltpu.CompilerParams(
            dimension_semantics=("parallel",),
            vmem_limit_bytes=VMEM_LIMIT_BYTES),
        cost_estimate=pl.CostEstimate(
            flops=2 * M * Cin * Cp + 3 * M * Cp,
            transcendentals=0,
            bytes_accessed=(M * Cin * xbytes + Cin * Cp * xbytes
                            + Cp * 4 + Npool * Cp * 4)),
    )(x_rows, w_fold, shift)

    # Slice off channel padding, restore NCHW.  (Drop this transpose if the
    # consumer accepts NHWC — it is a full relayout of the (4x smaller) output.)
    return (out2d[:, :Cout]
            .reshape(N, Ho, Wo, Cout)
            .transpose(0, 3, 1, 2))


def _reference(x, conv_w, conv_b, bn_gamma, bn_beta):
    """Pure-JAX reference matching the PyTorch forward (training-mode BN)."""
    y = lax.conv_general_dilated(
        x, conv_w, window_strides=(1, 1), padding="VALID",
        dimension_numbers=("NCHW", "OIHW", "NCHW"))
    y = y + conv_b.reshape(1, -1, 1, 1)
    mean = y.mean(axis=(0, 2, 3), keepdims=True)
    var = ((y - mean) ** 2).mean(axis=(0, 2, 3), keepdims=True)
    y = (y - mean) * lax.rsqrt(var + EPS) * bn_gamma.reshape(1, -1, 1, 1) \
        + bn_beta.reshape(1, -1, 1, 1)
    y = jnp.maximum(y, 0.0)
    N, C, H, W = y.shape
    return y.reshape(N, C, H // 2, 2, W // 2, 2).mean(axis=(3, 5))


if __name__ == "__main__":
    N, Cin, H, W = 2, 4, 16, 16
    Cout = 8

    key = jax.random.PRNGKey(0)
    kx, kw, kb, kg, kbt = jax.random.split(key, 5)
    x = jax.random.normal(kx, (N, Cin, H, W), dtype=jnp.float32)

    # Deterministic synthetic parameters (shapes match nn.Conv2d/BatchNorm2d).
    conv_w = jax.random.normal(kw, (Cout, Cin, 1, 1), dtype=jnp.float32) * 0.1
    conv_b = jax.random.normal(kb, (Cout,), dtype=jnp.float32) * 0.1
    bn_gamma = 1.0 + 0.1 * jax.random.normal(kg, (Cout,), dtype=jnp.float32)
    bn_beta = 0.1 * jax.random.normal(kbt, (Cout,), dtype=jnp.float32)

    ref = jax.block_until_ready(_reference(x, conv_w, conv_b, bn_gamma, bn_beta))

    # f32 path with max_tile_rows=128: 4 x-tiles -> exercises the multi-tile
    # stats accumulation, the 2-way phase-1 split, and the pooled output tiles.
    out_f32 = jax.block_until_ready(
        transition_block(x, conv_w, conv_b, bn_gamma, bn_beta,
                         matmul_dtype=jnp.float32, max_tile_rows=128))
    assert out_f32.shape == (N, Cout, H // 2, W // 2), out_f32.shape
    assert jnp.allclose(out_f32, ref, atol=1e-3, rtol=1e-3), \
        float(jnp.max(jnp.abs(out_f32 - ref)))

    # Default bf16 streaming path (looser tolerance vs the f32 reference).
    out_bf16 = jax.block_until_ready(
        transition_block(x, conv_w, conv_b, bn_gamma, bn_beta,
                         max_tile_rows=128))
    assert out_bf16.shape == (N, Cout, H // 2, W // 2), out_bf16.shape
    assert jnp.allclose(out_bf16, ref, atol=5e-2, rtol=5e-2), \
        float(jnp.max(jnp.abs(out_bf16 - ref)))

    print("KERNEL_OK")
</pallas_src>

<mosaic_0001>
module attributes {stable_mosaic.version = 11 : i64} {
  func.func @_stats_kernel(%arg0: i32, %arg1: i32, %arg2: memref<128x4xf32, #tpu.memory_space<vmem>>, %arg3: memref<1x1x4xf32, #tpu.memory_space<vmem>>, %arg4: memref<1x4x4xf32, #tpu.memory_space<vmem>>) attributes {dimension_semantics = [#tpu.dimension_semantics<parallel>, #tpu.dimension_semantics<arbitrary>], iteration_bounds = array<i64: 2, 2>, scalar_prefetch = 0 : i64, scratch_operands = 0 : i64, tpu.core_type = #tpu.core_type<tc>, window_params = [{transform_indices = @transform_0, window_bounds = array<i64: 128, 4>}, {transform_indices = @transform_1, window_bounds = array<i64: 1, 1, 4>}, {transform_indices = @transform_2, window_bounds = array<i64: 1, 4, 4>}]} {
    %c0_i32 = arith.constant 0 : i32
    %0 = arith.cmpi eq, %arg1, %c0_i32 : i32
    %1 = arith.extui %0 : i1 to i32
    %c0_i32_0 = arith.constant 0 : i32
    %2 = arith.cmpi ne, %1, %c0_i32_0 : i32
    scf.if %2 {
      %cst_15 = arith.constant 0.000000e+00 : f32
      %15 = vector.broadcast %cst_15 : f32 to vector<1x1x4xf32>
      %c0_16 = arith.constant 0 : index
      %c0_17 = arith.constant 0 : index
      %c0_18 = arith.constant 0 : index
      %16 = vector.load %arg3[%c0_16, %c0_17, %c0_18] : memref<1x1x4xf32, #tpu.memory_space<vmem>>, vector<1x1x4xf32>
      tpu.vector_store %arg3[%c0_16, %c0_17, %c0_18], %15 {strides = array<i32>} : memref<1x1x4xf32, #tpu.memory_space<vmem>>, vector<1x1x4xf32>,
      %cst_19 = arith.constant 0.000000e+00 : f32
      %17 = vector.broadcast %cst_19 : f32 to vector<1x4x4xf32>
      %c0_20 = arith.constant 0 : index
      %c0_21 = arith.constant 0 : index
      %c0_22 = arith.constant 0 : index
      %18 = vector.load %arg4[%c0_20, %c0_21, %c0_22] : memref<1x4x4xf32, #tpu.memory_space<vmem>>, vector<1x4x4xf32>
      tpu.vector_store %arg4[%c0_20, %c0_21, %c0_22], %17 {strides = array<i32>} : memref<1x4x4xf32, #tpu.memory_space<vmem>>, vector<1x4x4xf32>,
    } else {
    }
    %c0 = arith.constant 0 : index
    %c0_1 = arith.constant 0 : index
    %3 = vector.load %arg2[%c0, %c0_1] : memref<128x4xf32, #tpu.memory_space<vmem>>, vector<128x4xf32>
    %c0_2 = arith.constant 0 : index
    %c0_3 = arith.constant 0 : index
    %c0_4 = arith.constant 0 : index
    %4 = vector.load %arg3[%c0_2, %c0_3, %c0_4] : memref<1x1x4xf32, #tpu.memory_space<vmem>>, vector<1x1x4xf32>
    %cst = arith.constant dense<0.000000e+00> : vector<4xf32>
    %5 = vector.multi_reduction <add>, %3, %cst [0] : vector<128x4xf32> to vector<4xf32>
    %6 = vector.shape_cast %5 : vector<4xf32> to vector<1x4xf32>
    %7 = vector.shape_cast %6 : vector<1x4xf32> to vector<1x1x4xf32>
    %8 = arith.addf %4, %7 : vector<1x1x4xf32>
    %c0_5 = arith.constant 0 : index
    %c0_6 = arith.constant 0 : index
    %c0_7 = arith.constant 0 : index
    %9 = vector.load %arg3[%c0_5, %c0_6, %c0_7] : memref<1x1x4xf32, #tpu.memory_space<vmem>>, vector<1x1x4xf32>
    tpu.vector_store %arg3[%c0_5, %c0_6, %c0_7], %8 {strides = array<i32>} : memref<1x1x4xf32, #tpu.memory_space<vmem>>, vector<1x1x4xf32>,
    %c0_8 = arith.constant 0 : index
    %c0_9 = arith.constant 0 : index
    %c0_10 = arith.constant 0 : index
    %10 = vector.load %arg4[%c0_8, %c0_9, %c0_10] : memref<1x4x4xf32, #tpu.memory_space<vmem>>, vector<1x4x4xf32>
    %cst_11 = arith.constant dense<0.000000e+00> : vector<4x4xf32>
    %11 = tpu.matmul %3, %3, %cst_11 {dimension_numbers = #tpu.dot_dimension_numbers<[0], [0], [1], [1], [0, 1, 1, 1], [], []>} : vector<128x4xf32>, vector<128x4xf32>, vector<4x4xf32> -> vector<4x4xf32>
    %12 = vector.shape_cast %11 : vector<4x4xf32> to vector<1x4x4xf32>
    %13 = arith.addf %10, %12 : vector<1x4x4xf32>
    %c0_12 = arith.constant 0 : index
    %c0_13 = arith.constant 0 : index
    %c0_14 = arith.constant 0 : index
    %14 = vector.load %arg4[%c0_12, %c0_13, %c0_14] : memref<1x4x4xf32, #tpu.memory_space<vmem>>, vector<1x4x4xf32>
    tpu.vector_store %arg4[%c0_12, %c0_13, %c0_14], %13 {strides = array<i32>} : memref<1x4x4xf32, #tpu.memory_space<vmem>>, vector<1x4x4xf32>,
    return
  }
  func.func @transform_0(%arg0: i32, %arg1: i32) -> (i32, i32) {
    %c2_i32 = arith.constant 2 : i32
    %0 = arith.muli %arg0, %c2_i32 : i32
    %1 = arith.addi %0, %arg1 : i32
    %c0_i32 = arith.constant 0 : i32
    %c0_i32_0 = arith.constant 0 : i32
    return %1, %c0_i32 : i32, i32
  }
  func.func @transform_1(%arg0: i32, %arg1: i32) -> (i32, i32, i32) {
    %c0_i32 = arith.constant 0 : i32
    %c0_i32_0 = arith.constant 0 : i32
    %c0_i32_1 = arith.constant 0 : i32
    return %arg0, %c0_i32, %c0_i32_0 : i32, i32, i32
  }
  func.func @transform_2(%arg0: i32, %arg1: i32) -> (i32, i32, i32) {
    %c0_i32 = arith.constant 0 : i32
    %c0_i32_0 = arith.constant 0 : i32
    %c0_i32_1 = arith.constant 0 : i32
    return %arg0, %c0_i32, %c0_i32_0 : i32, i32, i32
  }
}

</mosaic_0001>

<llo_original>
// kernel: tpu_custom_call.1
$region0: #{tpu_custom_call.1}
  #allocation0 [shape = 'u32[]', space=smem, size = 0x4, offset = 0x4, fixed_abs, tag = 'smem constant byte address 0x4 - core index']
  #allocation1 [shape = 'u32[144,128]{1,0:T(1,128)}', space=vmem, size = 0x12000, scoped, tag = 'internal scratch']
  %s0 = inlined_call_operand.vmem [shape: f32[512,4], index: 0, kind: input, shape index: {}]
  %s1 = inlined_call_operand.hbm [shape: f32[2,1,4], index: 1, kind: output, shape index: {0}]
  %s2 = inlined_call_operand.hbm [shape: f32[2,4,4], index: 2, kind: output, shape index: {1}]
  %3 = xla_tuple %s1, %s2
  %s4 = sld [smem:[#allocation0]]
  $region49: #{tpu_custom_call.1} parent=0
    _
  %s6 = ssub.s32 1, %s4
  %s7 = scalar_select 0, %s6, %s4
  $region1: #{tpu_custom_call.1} parent=0
    #allocation2 [shape = 'u8[1024]{0}', space=vmem, size = 0x400, scoped, tag = 'output window, operand 0']
    #allocation3 [shape = 's32[2]{0}', space=sflag, size = 0x8, scoped, tag = 'scoped memory for tpu_custom_call.1']
    #allocation4 [shape = 'u8[4096]{0}', space=vmem, size = 0x1000, scoped, tag = 'output window, operand 1']
    #allocation5 [shape = 's32[2]{0}', space=sflag, size = 0x8, scoped, tag = 'scoped memory for tpu_custom_call.1']
    %8 = vsyncpa [#allocation3], 0
    %s9 = scalar_lea.sflag [#allocation3], 1
    %10 = vsyncpa %s9, 0
    %11 = vsyncpa [#allocation5], 0
    %s12 = scalar_lea.sflag [#allocation5], 1
    %13 = vsyncpa %s12, 0
    loop: start=0, step=1, limit=6
    $region2: #{tpu_custom_call.1} parent=1 // loop_pre_header
      _
    $region3: #{tpu_custom_call.1} parent=1 // loop_header
      %s15 = sphi 0, %s19
      %p16 = scmp.ge.s32.totalorder %s15, 6
      %s22 = sphi 0, %s34
      %s23 = sphi 0, %s30
      %s24 = sphi 0, %s22
      %s25 = sphi 0, %s23
      %s26 = sphi 0, %s24
      %s27 = sphi 0, %s25
      %s41 = sphi 0, %s43
      %s44 = sphi 0, %s41
      %s45 = sphi 0, %s44
      %s61 = sphi 0, %s45
      %s67 = sphi 0, %s69
      %s70 = sphi 0, %s67
      %s71 = sphi 0, %s70
      %s87 = sphi 0, %s71
      %s93 = sphi 0, %s95
      %s96 = sphi 0, %s93
      %s97 = sphi 0, %s96
      %s113 = sphi 0, %s97
    $region4: #{tpu_custom_call.1} parent=1 // loop_header_branch
      %18 = sbr.rel (%p16) target = $region8
    $region5: #{tpu_custom_call.1} parent=1 // loop_body
      %s20 = ssub.s32 %s15, 1
      %s21 = ssub.s32 %s15, 2
      %s28 = sadd.s32 1, %s23
      %p29 = scmp.ge.s32.totalorder %s28, 2
      %s30 = scalar_select %p29, 0, %s28
      %s31 = sadd.s32 1, %s22
      %s32 = scalar_select %p29, %s31, %s22
      %p33 = scmp.ge.s32.totalorder %s32, 2
      %s34 = scalar_select %p33, 0, %s32
      %s35 = smul.u32 %s22, 2
      %s36 = sadd.s32 %s35, %s23
      %s37 = smul.u32 %s34, 2
      %s38 = sadd.s32 %s37, %s30
      %s39 = ssub.s32 %s36, %s38
      %p40 = scmp.eq.s32.totalorder %s39, 0
      %s42 = sadd.s32 %s41, 1
      %s43 = scalar_select %p40, %s41, %s42
      %p46 = pneg %p40
      %p47 = scmp.eq.s32.totalorder %s15, 3
      %p48 = por %p46, %p47
      %p49 = scmp.ne.s32.totalorder %s41, %s44
      %p50 = scmp.eq.s32.totalorder %s15, 0
      %p51 = por %p49, %p50
      %p52 = scmp.ne.s32.totalorder %s41, %s44
      %p53 = scmp.eq.s32.totalorder %s20, 3
      %p54 = por %p52, %p53
      %p55 = scmp.ne.s32.totalorder %s44, %s45
      %p56 = scmp.eq.s32.totalorder %s20, 0
      %p57 = por %p55, %p56
      %p58 = scmp.ne.s32.totalorder %s44, %s45
      %p59 = scmp.eq.s32.totalorder %s21, 3
      %p60 = por %p58, %p59
      %p62 = scmp.ne.s32.totalorder %s45, %s61
      %p63 = scmp.eq.s32.totalorder %s21, 0
      %p64 = por %p62, %p63
      %s65 = ssub.s32 %s22, %s34
      %p66 = scmp.eq.s32.totalorder %s65, 0
      %s68 = sadd.s32 %s67, 1
      %s69 = scalar_select %p66, %s67, %s68
      %p72 = pneg %p66
      %p73 = scmp.eq.s32.totalorder %s15, 3
      %p74 = por %p72, %p73
      %p75 = scmp.ne.s32.totalorder %s67, %s70
      %p76 = scmp.eq.s32.totalorder %s15, 0
      %p77 = por %p75, %p76
      %p78 = scmp.ne.s32.totalorder %s67, %s70
      %p79 = scmp.eq.s32.totalorder %s20, 3
      %p80 = por %p78, %p79
      %p81 = scmp.ne.s32.totalorder %s70, %s71
      %p82 = scmp.eq.s32.totalorder %s20, 0
      %p83 = por %p81, %p82
      %p84 = scmp.ne.s32.totalorder %s70, %s71
      %p85 = scmp.eq.s32.totalorder %s21, 3
      %p86 = por %p84, %p85
      %p88 = scmp.ne.s32.totalorder %s71, %s87
      %p89 = scmp.eq.s32.totalorder %s21, 0
      %p90 = por %p88, %p89
      %s91 = ssub.s32 %s22, %s34
      %p92 = scmp.eq.s32.totalorder %s91, 0
      %s94 = sadd.s32 %s93, 1
      %s95 = scalar_select %p92, %s93, %s94
      %p98 = pneg %p92
      %p99 = scmp.eq.s32.totalorder %s15, 3
      %p100 = por %p98, %p99
      %p101 = scmp.ne.s32.totalorder %s93, %s96
      %p102 = scmp.eq.s32.totalorder %s15, 0
      %p103 = por %p101, %p102
      %p104 = scmp.ne.s32.totalorder %s93, %s96
      %p105 = scmp.eq.s32.totalorder %s20, 3
      %p106 = por %p104, %p105
      %p107 = scmp.ne.s32.totalorder %s96, %s97
      %p108 = scmp.eq.s32.totalorder %s20, 0
      %p109 = por %p107, %p108
      %p110 = scmp.ne.s32.totalorder %s96, %s97
      %p111 = scmp.eq.s32.totalorder %s21, 3
      %p112 = por %p110, %p111
      %p114 = scmp.ne.s32.totalorder %s97, %s113
      %p115 = scmp.eq.s32.totalorder %s21, 0
      %p116 = por %p114, %p115
      %p117 = scmp.le.s32.totalorder 1, %s15
      %p118 = scmp.lt.s32.totalorder %s15, 5
      %p119 = pnand %p117, %p118
      %p120 = pneg %p119
      // Predicated region
      $region9: #{tpu_custom_call.1} parent=5 // pred_check
        _
      $region10: #{tpu_custom_call.1} parent=5 // pred_check_branch
        %122 = sbr.rel (%p119) target = $region12
      $region11: #{tpu_custom_call.1} parent=5 // pred_region
        %s123 = ssub.s32 %s15, 1
      $region12: #{tpu_custom_call.1} parent=5 // pred_fallthru
        _
      %p124 = scmp.lt.s32.totalorder %s15, 4
      // Predicated region
      $region13: #{tpu_custom_call.1} parent=5 // pred_check
        %p125 = pneg %p124
      $region14: #{tpu_custom_call.1} parent=5 // pred_check_branch
        %127 = sbr.rel (%p125) target = $region16
      $region15: #{tpu_custom_call.1} parent=5 // pred_region
        // Predicated region
        $region17: #{tpu_custom_call.1} parent=15 // pred_check
          %p128 = pneg %p51
        $region18: #{tpu_custom_call.1} parent=15 // pred_check_branch
          %130 = sbr.rel (%p128) target = $region20
        $region19: #{tpu_custom_call.1} parent=15 // pred_region
          %s131 = smul.u32 %s22, 2
          %s132 = sadd.s32 %s131, %s23
          %s133 = smul.u32 16, %s132
          %p134 = scmp.lt.s32.totalorder %s133, 63
          %s135 = scalar_select %p134, %s133, 63
          %s136 = smul.addr %s135, 8
          %s137 = scalar_lea.vmem %s0, %s136
          %s138 = smul.u32 %s22, 2
          %s139 = sadd.s32 %s138, %s23
          %s140 = smul.u32 16, %s139
        $region20: #{tpu_custom_call.1} parent=15 // pred_fallthru
          _
      $region16: #{tpu_custom_call.1} parent=5 // pred_fallthru
        _
      %p141 = scmp.le.s32.totalorder 1, %s15
      %p142 = scmp.lt.s32.totalorder %s15, 5
      %p143 = pnand %p141, %p142
      %p144 = pneg %p143
      // Predicated region
      $region21: #{tpu_custom_call.1} parent=5 // pred_check
        _
      $region22: #{tpu_custom_call.1} parent=5 // pred_check_branch
        %146 = sbr.rel (%p143) target = $region24
      $region23: #{tpu_custom_call.1} parent=5 // pred_region
        %s147 = ssub.s32 %s15, 1
        %s148 = smul.u32 %s24, 2
        %s149 = sadd.s32 %s148, %s25
        %s150 = smul.u32 16, %s149
        %p151 = scmp.lt.s32.totalorder %s150, 63
        %s152 = scalar_select %p151, %s150, 63
        %s153 = smul.addr %s152, 8
        %s154 = scalar_lea.vmem %s0, %s153
        %p155 = pneg %p57
        %p156 = pneg %p54
        %p157 = pneg %p83
        %p158 = pneg %p80
        %s159 = sand.u32 %s70, 1
        %s160 = scalar_lea.sflag [#allocation3], %s159
        %s161 = sand.u32 %s70, 1
        %s162 = scalar_lea.vmem [#allocation2], %s161
        %p163 = pneg %p109
        %p164 = pneg %p106
        %s165 = sand.u32 %s96, 1
        %s166 = scalar_lea.sflag [#allocation5], %s165
        %s167 = sand.u32 %s96, 1
        %s168 = smul.addr %s167, 4
        %s169 = scalar_lea.vmem [#allocation4], %s168
        %s170 = smul.u32 %s24, 2
        %s171 = sadd.s32 %s170, %s25
        %s172 = smul.u32 16, %s171
        %p173 = scmp.lt.s32.totalorder %s172, 63
        %s174 = scalar_select %p173, %s172, 63
        %s175 = smul.addr %s174, 8
        %s176 = scalar_lea.vmem %s0, %s175
        %s177 = smul.u32 %s24, 2
        %s178 = sadd.s32 %s177, %s25
        %s179 = smul.u32 16, %s178
        %p180 = scmp.eq.s32.totalorder %s25, 0
        // Predicated region
        $region25: #{tpu_custom_call.1} parent=23 // pred_check
          %p181 = pneg %p180
        $region26: #{tpu_custom_call.1} parent=23 // pred_check_branch
          %183 = sbr.rel (%p181) target = $region28
        $region27: #{tpu_custom_call.1} parent=23 // pred_region
          %vm184 = vcmask 24576
          %185 = vst.msk [vmem:[%s162] sm:$0x1] %vm184, 0.0
          %vm186 = vcmask 27648
          %187 = vst.msk [vmem:[%s169] sm:$0xf] %vm186, 0.0
        $region28: #{tpu_custom_call.1} parent=23 // pred_fallthru
          _
        %v188 = vld [vmem:[%s176] sm:$0xff]
        %v189 = vld [vmem:[%s176 + $0x8] sm:$0xff]
        %v190 = vld [vmem:[%s176 + $0x10] sm:$0xff]
        %v191 = vld [vmem:[%s176 + $0x18] sm:$0xff]
        %v192 = vld [vmem:[%s176 + $0x20] sm:$0xff]
        %v193 = vld [vmem:[%s176 + $0x28] sm:$0xff]
        %v194 = vld [vmem:[%s176 + $0x30] sm:$0xff]
        %v195 = vld [vmem:[%s176 + $0x38] sm:$0xff]
        %v196 = vld [vmem:[%s176 + $0x40] sm:$0xff]
        %v197 = vld [vmem:[%s176 + $0x48] sm:$0xff]
        %v198 = vld [vmem:[%s176 + $0x50] sm:$0xff]
        %v199 = vld [vmem:[%s176 + $0x58] sm:$0xff]
        %v200 = vld [vmem:[%s176 + $0x60] sm:$0xff]
        %v201 = vld [vmem:[%s176 + $0x68] sm:$0xff]
        %v202 = vld [vmem:[%s176 + $0x70] sm:$0xff]
        %v203 = vld [vmem:[%s176 + $0x78] sm:$0xff]
        %v204 = vld [vmem:[%s162] sm:$0x1]
        %vm205 = vcmask 31744
        %v206 = vsel %vm205, %v188, 0.0
        %v207 = vsel %vm205, %v189, 0.0
        %v208 = vadd.f32 %v206, %v207
        %v209 = vsel %vm205, %v190, 0.0
        %v210 = vadd.f32 %v208, %v209
        %v211 = vsel %vm205, %v191, 0.0
        %v212 = vadd.f32 %v210, %v211
        %v213 = vsel %vm205, %v192, 0.0
        %v214 = vadd.f32 %v212, %v213
        %v215 = vsel %vm205, %v193, 0.0
        %v216 = vadd.f32 %v214, %v215
        %v217 = vsel %vm205, %v194, 0.0
        %v218 = vadd.f32 %v216, %v217
        %v219 = vsel %vm205, %v195, 0.0
        %v220 = vadd.f32 %v218, %v219
        %v221 = vsel %vm205, %v196, 0.0
        %v222 = vadd.f32 %v220, %v221
        %v223 = vsel %vm205, %v197, 0.0
        %v224 = vadd.f32 %v222, %v223
        %v225 = vsel %vm205, %v198, 0.0
        %v226 = vadd.f32 %v224, %v225
        %v227 = vsel %vm205, %v199, 0.0
        %v228 = vadd.f32 %v226, %v227
        %v229 = vsel %vm205, %v200, 0.0
        %v230 = vadd.f32 %v228, %v229
        %v231 = vsel %vm205, %v201, 0.0
        %v232 = vadd.f32 %v230, %v231
        %v233 = vsel %vm205, %v202, 0.0
        %v234 = vadd.f32 %v232, %v233
        %v235 = vsel %vm205, %v203, 0.0
        %v236 = vadd.f32 %v234, %v235
        %v237 = vrot.slane %v236, 4
        %v238 = vadd.f32 %v236, %v237
        %v239 = vrot.slane %v238, 2
        %v240 = vadd.f32 %v238, %v239
        %v241 = vrot.slane %v240, 1
        %v242 = vadd.f32 %v240, %v241
        %v243 = vadd.f32 %v204, %v242
        %vm244 = vcmask 24576
        %245 = vst.msk [vmem:[%s162] sm:$0x1] %vm244, %v243
        %v246 = vld [vmem:[%s169] sm:$0xf]
        %247 = vxpose.xlu0.b32.start [1/16] %v188, 128
        %248 = vxpose.xlu0.b32.cont [2/16] %v189, 128
        %249 = vxpose.xlu0.b32.cont [3/16] %v190, 128
        %250 = vxpose.xlu0.b32.cont [4/16] %v191, 128
        %251 = vxpose.xlu0.b32.cont [5/16] %v192, 128
        %252 = vxpose.xlu0.b32.cont [6/16] %v193, 128
        %253 = vxpose.xlu0.b32.cont [7/16] %v194, 128
        %254 = vxpose.xlu0.b32.cont [8/16] %v195, 128
        %255 = vxpose.xlu0.b32.cont [9/16] %v196, 128
        %256 = vxpose.xlu0.b32.cont [10/16] %v197, 128
        %257 = vxpose.xlu0.b32.cont [11/16] %v198, 128
        %258 = vxpose.xlu0.b32.cont [12/16] %v199, 128
        %259 = vxpose.xlu0.b32.cont [13/16] %v200, 128
        %260 = vxpose.xlu0.b32.cont [14/16] %v201, 128
        %261 = vxpose.xlu0.b32.cont [15/16] %v202, 128
        %262 = vxpose.xlu0.b32.end [16/16] %v203, 128
        %v263 = vpop.trf.xlu0
        %v264 = vpop.trf.xlu0
        %v265 = vpop.trf.xlu0
        %v266 = vpop.trf.xlu0
        %v267 = vpop.trf.xlu0
        %v268 = vpop.trf.xlu0
        %v269 = vpop.trf.xlu0
        %v270 = vpop.trf.xlu0
        %v271 = vpop.trf.xlu0
        %v272 = vpop.trf.xlu0
        %v273 = vpop.trf.xlu0
        %v274 = vpop.trf.xlu0
        %v275 = vpop.trf.xlu0
        %v276 = vpop.trf.xlu0
        %v277 = vpop.trf.xlu0
        %v278 = vpop.trf.xlu0
        %279 = vmatprep.subr.mxu0 0.0
        %280 = vmatpush1.msra.mxu0 %v188
        %281 = vmatprep.subr.mxu0 0.0
        %282 = vmatpush1.msra.mxu0 %v189
        %283 = vmatprep.subr.mxu0 0.0
        %284 = vmatpush1.msra.mxu0 %v190
        %285 = vmatprep.subr.mxu0 0.0
        %286 = vmatpush1.msra.mxu0 %v191
        %287 = vmatprep.subr.mxu0 0.0
        %288 = vmatpush1.msra.mxu0 %v192
        %289 = vmatprep.subr.mxu0 0.0
        %290 = vmatpush1.msra.mxu0 %v193
        %291 = vmatprep.subr.mxu0 0.0
        %292 = vmatpush1.msra.mxu0 %v194
        %293 = vmatprep.subr.mxu0 0.0
        %294 = vmatpush1.msra.mxu0 %v195
        %295 = vmatprep.subr.mxu0 0.0
        %296 = vmatpush1.msra.mxu0 %v196
        %297 = vmatprep.subr.mxu0 0.0
        %298 = vmatpush1.msra.mxu0 %v197
        %299 = vmatprep.subr.mxu0 0.0
        %300 = vmatpush1.msra.mxu0 %v198
        %301 = vmatprep.subr.mxu0 0.0
        %302 = vmatpush1.msra.mxu0 %v199
        %303 = vmatprep.subr.mxu0 0.0
        %304 = vmatpush1.msra.mxu0 %v200
        %305 = vmatprep.subr.mxu0 0.0
        %306 = vmatpush1.msra.mxu0 %v201
        %307 = vmatprep.subr.mxu0 0.0
        %308 = vmatpush1.msra.mxu0 %v202
        %309 = vmatprep.subr.mxu0 0.0
        %310 = vmatpush1.msra.mxu0 %v203
        %311 = vmatprep.subr.mxu0 0.0
        %312 = vmatpush1.msra.mxu0 0.0
        %313 = vmatprep.subr.mxu0 0.0
        %314 = vmatpush1.msra.mxu0 0.0
        %315 = vmatprep.subr.mxu0 0.0
        %316 = vmatpush1.msra.mxu0 0.0
        %317 = vmatprep.subr.mxu0 0.0
        %318 = vmatpush1.msra.mxu0 0.0
        %319 = vmatprep.subr.mxu0 0.0
        %320 = vmatpush1.msra.mxu0 0.0
        %321 = vmatprep.subr.mxu0 0.0
        %322 = vmatpush1.msra.mxu0 0.0
        %323 = vmatprep.subr.mxu0 0.0
        %324 = vmatpush1.msra.mxu0 0.0
        %325 = vmatprep.subr.mxu0 0.0
        %326 = vmatpush1.msra.mxu0 0.0
        %327 = vmatprep.subr.mxu0 0.0
        %328 = vmatpush1.msra.mxu0 0.0
        %329 = vmatprep.subr.mxu0 0.0
        %330 = vmatpush1.msra.mxu0 0.0
        %331 = vmatprep.subr.mxu0 0.0
        %332 = vmatpush1.msra.mxu0 0.0
        %333 = vmatprep.subr.mxu0 0.0
        %334 = vmatpush1.msra.mxu0 0.0
        %335 = vmatprep.subr.mxu0 0.0
        %336 = vmatpush1.msra.mxu0 0.0
        %337 = vmatprep.subr.mxu0 0.0
        %338 = vmatpush1.msra.mxu0 0.0
        %339 = vmatprep.subr.mxu0 0.0
        %340 = vmatpush1.msra.mxu0 0.0
        %341 = vmatprep.subr.mxu0 0.0
        %342 = vmatpush1.msra.mxu0 0.0
        %343 = vmatprep.mubr.f32.mxu0 0.0
        %344 = vmatmul.mubr.f32.gmra.mrb[0].mxu0 %v263
        %v345 = vpop.f32.mrb[0].mxu0
        %v346 = vadd.f32 0.0, %v345
        %v347 = vpop.f32.mrb[0].mxu0
        %348 = vdwg.mxu0
        %v349 = vadd.f32 %v246, %v346
        %vm350 = vcmask 27648
        %351 = vst.msk [vmem:[%s169] sm:$0xf] %vm350, %v349
        %s352 = sand.u32 %s70, 1
        %s353 = scalar_lea.sflag [#allocation3], %s352
        %s354 = sand.u32 %s70, 1
        %s355 = scalar_lea.vmem [#allocation2], %s354
        %s356 = sand.u32 %s96, 1
        %s357 = scalar_lea.sflag [#allocation5], %s356
        %s358 = sand.u32 %s96, 1
        %s359 = smul.addr %s358, 4
        %s360 = scalar_lea.vmem [#allocation4], %s359
        // Predicated region
        $region29: #{tpu_custom_call.1} parent=23 // pred_check
          %p361 = pneg %p80
        $region30: #{tpu_custom_call.1} parent=23 // pred_check_branch
          %363 = sbr.rel (%p361) target = $region32
        $region31: #{tpu_custom_call.1} parent=23 // pred_region
          %s365 = ssub.s32 16, 16
          %366 = vsyncadd %s353, %s365
          %s367 = smul.addr %s24, 16
          %s368 = scalar_lea.hbm %s1, %s367
          %s370 = sshll.u32 %s355, 4
          %s371 = int_to_ptr.vmem [resolvable:$true] %s370
          %373 = dma.vmem_to_hbm [thread:$0]  %s371, 16, %s368, %s353
        $region32: #{tpu_custom_call.1} parent=23 // pred_fallthru
          _
        // Predicated region
        $region33: #{tpu_custom_call.1} parent=23 // pred_check
          %p374 = pneg %p106
        $region34: #{tpu_custom_call.1} parent=23 // pred_check_branch
          %376 = sbr.rel (%p374) target = $region36
        $region35: #{tpu_custom_call.1} parent=23 // pred_region
          %s378 = ssub.s32 64, 64
          %379 = vsyncadd %s357, %s378
          %s380 = smul.addr %s24, 64
          %s381 = scalar_lea.hbm %s2, %s380
          %s383 = sshll.u32 %s360, 4
          %s384 = int_to_ptr.vmem [resolvable:$true] %s383
          %386 = dma.vmem_to_hbm [thread:$0]  %s384, 64, %s381, %s357
        $region36: #{tpu_custom_call.1} parent=23 // pred_fallthru
          _
      $region24: #{tpu_custom_call.1} parent=5 // pred_fallthru
        _
      %p387 = scmp.le.s32.totalorder 2, %s15
      // Predicated region
      $region37: #{tpu_custom_call.1} parent=5 // pred_check
        %p388 = pneg %p387
      $region38: #{tpu_custom_call.1} parent=5 // pred_check_branch
        %390 = sbr.rel (%p388) target = $region40
      $region39: #{tpu_custom_call.1} parent=5 // pred_region
        %s391 = ssub.s32 %s15, 2
        // Predicated region
        $region41: #{tpu_custom_call.1} parent=39 // pred_check
          %p392 = pneg %p86
        $region42: #{tpu_custom_call.1} parent=39 // pred_check_branch
          %394 = sbr.rel (%p392) target = $region44
        $region43: #{tpu_custom_call.1} parent=39 // pred_region
          %s395 = sand.u32 %s71, 1
          %s396 = scalar_lea.sflag [#allocation3], %s395
          %s397 = sand.u32 %s71, 1
          %s398 = scalar_lea.vmem [#allocation2], %s397
          %399 = dma.done %s396, 16
        $region44: #{tpu_custom_call.1} parent=39 // pred_fallthru
          _
        // Predicated region
        $region45: #{tpu_custom_call.1} parent=39 // pred_check
          %p400 = pneg %p112
        $region46: #{tpu_custom_call.1} parent=39 // pred_check_branch
          %402 = sbr.rel (%p400) target = $region48
        $region47: #{tpu_custom_call.1} parent=39 // pred_region
          %s403 = sand.u32 %s97, 1
          %s404 = scalar_lea.sflag [#allocation5], %s403
          %s405 = sand.u32 %s97, 1
          %s406 = smul.addr %s405, 4
          %s407 = scalar_lea.vmem [#allocation4], %s406
          %408 = dma.done %s404, 64
        $region48: #{tpu_custom_call.1} parent=39 // pred_fallthru
          _
      $region40: #{tpu_custom_call.1} parent=5 // pred_fallthru
        _
    $region6: #{tpu_custom_call.1} parent=1 // loop_footer
      %s19 = sadd.s32 1, %s15
    $region7: #{tpu_custom_call.1} parent=1 // loop_footer_branch
      %14 = sbr.rel target = $region3
    $region8: #{tpu_custom_call.1} parent=1 // loop_exit
      _
    %409 = vsyncpa [#allocation3], 1
    %s410 = scalar_lea.sflag [#allocation3], 1
    %411 = vsyncpa %s410, 1
    %412 = vsyncpa [#allocation5], 1
    %s413 = scalar_lea.sflag [#allocation5], 1
    %414 = vsyncpa %s413, 1

</llo_original>
